<compile_context>
chip_gen: v7x
topology: tpu7x:2x2x1
jax: 0.10.0
libtpu: 0.0.40
codegen_flags: <defaults>
</compile_context>

<pallas_src>
import math
import functools

import jax
import jax.numpy as jnp
from jax.experimental import pallas as pl
from jax.experimental.pallas import tpu as pltpu


# ---------------------------------------------------------------------------
# Kernel: out = dropout(x * scale + pe)   on a lane-dense (rows, lanes) block
# ---------------------------------------------------------------------------
def _pos_enc_kernel(seed_ref, x_ref, pe_ref, o_ref, *, p, scale):
    # x_ref : (TB, TL) lane-dense block (rows = batch elems, lanes = flat S*D)
    # pe_ref: (1, TL)  positional-encoding slab, broadcast across rows
    x = x_ref[...]
    if scale != 1.0:
        # Fused Embeddings scale: free in the VALU slot of a mem-bound kernel.
        x = x * jnp.asarray(scale, dtype=x.dtype)
    y = x + pe_ref[...]                    # stays in the input dtype

    if p > 0.0:
        # Inverted dropout with the hardware PRNG.  Block indices are extra
        # seed words (not consecutive-integer offsets) for per-block
        # mask independence.
        pltpu.prng_seed(seed_ref[0], pl.program_id(0), pl.program_id(1))
        bits = pltpu.prng_random_bits(y.shape)
        u32 = pltpu.bitcast(bits, jnp.uint32)      # no-op if already uint32
        # drop iff u32 < floor(p * 2^32); bias vs. exact p is < 2^-32.
        thresh = jnp.uint32(min(int(p * 4294967296.0), 4294967295))
        keep = u32 >= thresh
        inv_keep = jnp.asarray(1.0 / (1.0 - p), dtype=y.dtype)
        y = jnp.where(keep, y * inv_keep, jnp.zeros_like(y))

    o_ref[...] = y.astype(o_ref.dtype)


def _round_down(x, m):
    return (x // m) * m


def positional_encoding_forward(x, pe_flat, *, p=0.0, seed=0, scale=1.0,
                                target_block_bytes=2 * 1024 * 1024,
                                donate_x=True):
    """out = dropout(x * scale + pe);  x: (B, S, D), pe_flat: (1, S*D)."""
    B, S, D = x.shape
    dtype = x.dtype
    itemsize = jnp.dtype(dtype).itemsize
    L = S * D
    assert pe_flat.shape == (1, L), (pe_flat.shape, (1, L))
    assert pe_flat.dtype == dtype, "prepare pe_flat once in the model dtype"

    # Lane-dense 2-D view (the biggest single lever for this mem-bound kernel).
    x2 = x.reshape(B, L)
    seed_arr = jnp.array([seed], dtype=jnp.int32)

    # ---- tile selection -------------------------------------------------
    # Budget the block-sized uint32 random-bits buffer + keep mask when
    # dropout is active.
    eff_block_bytes = target_block_bytes // 2 if p > 0.0 else target_block_bytes

    # dtype-aware sublane alignment: 8 rows f32, 16 rows bf16, 32 rows int8.
    row_align = max(8, 32 // itemsize)

    # Reserve the row dimension first ...
    tb = B if B < row_align else row_align
    # ... then size the lane tile from the remaining budget (multiple of 128,
    # or the full extent).  No full-array fallback: cdiv masks ragged blocks.
    lane_budget = max(128, eff_block_bytes // (tb * itemsize))
    tl = L if L <= lane_budget else max(128, _round_down(lane_budget, 128))

    # Lane-tile index is the OUTER axis so the pe block stays resident across
    # the batch-row sweep.
    grid = (pl.cdiv(L, tl), pl.cdiv(B, tb))

    kernel = functools.partial(_pos_enc_kernel, p=p, scale=scale)

    out2 = pl.pallas_call(
        kernel,
        out_shape=jax.ShapeDtypeStruct((B, L), dtype),
        grid=grid,
        in_specs=[
            # Scalar dropout seed lives in SMEM; it never feeds an index_map,
            # so no scalar-prefetch machinery is needed.
            pl.BlockSpec(memory_space=pltpu.MemorySpace.SMEM),
            pl.BlockSpec((tb, tl), lambda j, i: (i, j)),
            # pe block depends only on the (outer) lane-tile index, so it is
            # DMA'd once per lane tile and reused across all row tiles.
            pl.BlockSpec((1, tl), lambda j, i: (0, j)),
        ],
        out_specs=pl.BlockSpec((tb, tl), lambda j, i: (i, j)),
        # x2 is operand index 1 (after the seed); same shape/dtype as out.
        input_output_aliases=({1: 0} if donate_x else {}),
        compiler_params=pltpu.CompilerParams(
            # Both grid axes are independent -> shard across v7x's 2 TCs.
            dimension_semantics=("parallel", "parallel"),
        ),
    )(seed_arr, x2, pe_flat)

    return out2.reshape(B, S, D)


# ---------------------------------------------------------------------------
# Plain-JAX glue: sinusoidal PE table, flat-slab prep, and the Embeddings
# front-end (gather only; the * sqrt(d_model) scale is fused into the kernel).
# ---------------------------------------------------------------------------
def make_pe_table(max_len, d_model, dtype=jnp.float32):
    position = jnp.arange(max_len, dtype=jnp.float32)[:, None]            # (L,1)
    div_term = jnp.exp(
        jnp.arange(0, d_model, 2, dtype=jnp.float32)
        * -(math.log(10000.0) / d_model)
    )                                                                      # (D/2,)
    pe = jnp.zeros((max_len, d_model), dtype=jnp.float32)
    pe = pe.at[:, 0::2].set(jnp.sin(position * div_term))
    pe = pe.at[:, 1::2].set(jnp.cos(position * div_term))
    return pe.astype(dtype)


def prepare_pe_slab(pe_table, seq_len, dtype):
    """Hoisted out of the per-call path: flat (1, S*D) slab in the model dtype."""
    S, D = seq_len, pe_table.shape[1]
    return pe_table[:S, :].astype(dtype).reshape(1, S * D)


def embeddings_gather(token_ids, lut):
    # Embeddings.forward minus the scale (scale is fused into the PE kernel).
    # TODO(synk): fuse the gather itself into the Pallas kernel via a
    # row-gather BlockSpec (pl.Element) if the embedding pass becomes hot.
    return lut[token_ids]


# ---------------------------------------------------------------------------
if __name__ == "__main__":
    # Small, deterministic shapes consistent with the module's forward:
    batch, seq, d_model, vocab, max_len = 2, 8, 32, 100, 60
    dropout_p = 0.0  # matches `pe = PositionalEncoding(20, 0)` (p=0 -> identity dropout)

    key = jax.random.PRNGKey(0)
    k_lut, k_tok = jax.random.split(key)

    # Deterministic "parameters": embedding table (vocab, d_model).
    lut = jax.random.normal(k_lut, (vocab, d_model), dtype=jnp.float32)
    token_ids = jax.random.randint(k_tok, (batch, seq), 0, vocab)

    # Front-end embedding gather (plain JAX glue; scale fused into the kernel).
    x = embeddings_gather(token_ids, lut)                     # (B, S, D)

    # Positional-encoding table, prepared ONCE as a flat slab in model dtype.
    pe_table = make_pe_table(max_len, d_model, dtype=jnp.float32)
    pe_flat = prepare_pe_slab(pe_table, seq, x.dtype)          # (1, S*D)

    # Run the Pallas kernel: out = dropout(x * sqrt(d_model) + pe).
    out = positional_encoding_forward(
        x, pe_flat, p=dropout_p, seed=0, scale=math.sqrt(d_model))
    out = jax.block_until_ready(out)

    # Reference check (p=0 => deterministic).
    ref = x * math.sqrt(d_model) + pe_table[:seq][None, :, :]
    assert out.shape == (batch, seq, d_model)
    assert jnp.allclose(out, ref, atol=1e-5, rtol=1e-5)

    print("KERNEL_OK")
</pallas_src>

<mosaic_0001>
module attributes {stable_mosaic.version = 11 : i64} {
  func.func @_pos_enc_kernel(%arg0: i32, %arg1: i32, %arg2: memref<1xi32, #tpu.memory_space<smem>>, %arg3: memref<2x256xf32, #tpu.memory_space<vmem>>, %arg4: memref<1x256xf32, #tpu.memory_space<vmem>>, %arg5: memref<2x256xf32, #tpu.memory_space<vmem>>) attributes {dimension_semantics = [#tpu.dimension_semantics<parallel>, #tpu.dimension_semantics<parallel>], iteration_bounds = array<i64: 1, 1>, scalar_prefetch = 0 : i64, scratch_operands = 0 : i64, tpu.core_type = #tpu.core_type<tc>, window_params = [{transform_indices = @transform_0, window_bounds = array<i64: 1>}, {transform_indices = @transform_1, window_bounds = array<i64: 2, 256>}, {transform_indices = @transform_2, window_bounds = array<i64: 1, 256>}, {transform_indices = @transform_3, window_bounds = array<i64: 2, 256>}]} {
    %c0 = arith.constant 0 : index
    %c0_0 = arith.constant 0 : index
    %0 = vector.load %arg3[%c0, %c0_0] : memref<2x256xf32, #tpu.memory_space<vmem>>, vector<2x256xf32>
    %cst = arith.constant 5.65685415 : f32
    %1 = vector.broadcast %cst : f32 to vector<2x256xf32>
    %2 = arith.mulf %0, %1 : vector<2x256xf32>
    %c0_1 = arith.constant 0 : index
    %c0_2 = arith.constant 0 : index
    %3 = vector.load %arg4[%c0_1, %c0_2] : memref<1x256xf32, #tpu.memory_space<vmem>>, vector<1x256xf32>
    %4 = vector.broadcast %3 : vector<1x256xf32> to vector<2x256xf32>
    %5 = arith.addf %2, %4 : vector<2x256xf32>
    %c0_3 = arith.constant 0 : index
    %c0_4 = arith.constant 0 : index
    %6 = vector.load %arg5[%c0_3, %c0_4] : memref<2x256xf32, #tpu.memory_space<vmem>>, vector<2x256xf32>
    tpu.vector_store %arg5[%c0_3, %c0_4], %5 {strides = array<i32>} : memref<2x256xf32, #tpu.memory_space<vmem>>, vector<2x256xf32>,
    return
  }
  func.func @transform_0(%arg0: i32, %arg1: i32) -> i32 {
    %c0_i32 = arith.constant 0 : i32
    %c0_i32_0 = arith.constant 0 : i32
    return %c0_i32 : i32
  }
  func.func @transform_1(%arg0: i32, %arg1: i32) -> (i32, i32) {
    %c0_i32 = arith.constant 0 : i32
    return %arg1, %arg0 : i32, i32
  }
  func.func @transform_2(%arg0: i32, %arg1: i32) -> (i32, i32) {
    %c0_i32 = arith.constant 0 : i32
    %c0_i32_0 = arith.constant 0 : i32
    return %c0_i32, %arg0 : i32, i32
  }
  func.func @transform_3(%arg0: i32, %arg1: i32) -> (i32, i32) {
    %c0_i32 = arith.constant 0 : i32
    return %arg1, %arg0 : i32, i32
  }
}

</mosaic_0001>

<llo_original>
// kernel: tpu_custom_call.1
$region0: #{tpu_custom_call.1}
  #allocation0 [shape = 'u32[]', space=smem, size = 0x4, offset = 0x4, fixed_abs, tag = 'smem constant byte address 0x4 - core index']
  #allocation1 [shape = 'u32[144,128]{1,0:T(1,128)}', space=vmem, size = 0x12000, scoped, tag = 'internal scratch']
  #allocation2 [shape = 's32[1]{0:T(128)S(6)}', space=smem, size = 0x200, scoped, tag = 'scoped memory for tpu_custom_call.1']
  %s0 = inlined_call_operand.<no memory space> [shape: s32[1], index: 0, kind: input, shape index: {}]
  %s1 = inlined_call_operand.hbm [shape: f32[2,256], index: 1, kind: input, shape index: {}, may-alias: {1,3}]
  %s2 = inlined_call_operand.vmem [shape: f32[1,256], index: 2, kind: input, shape index: {}]
  %s3 = inlined_call_operand.hbm [shape: f32[2,256], index: 3, kind: output, shape index: {}, may-alias: {1,3}]
  %s4 = sld [smem:[#allocation0]]
  $region26: #{tpu_custom_call.1} parent=0
    _
  %s6 = ssub.s32 1, %s4
  %s7 = scalar_select 0, %s6, %s4
  %8 = sst [smem:[#allocation2]] %s0
  $region1: #{tpu_custom_call.1} parent=0
    #allocation3 [shape = 'u8[2048]{0}', space=vmem, size = 0x800, scoped, tag = 'input window, operand 1, single buffered']
    #allocation4 [shape = 's32[1]{0}', space=sflag, size = 0x4, scoped, tag = 'scoped memory for tpu_custom_call.1']
    #allocation5 [shape = 's32[1]{0}', space=sflag, size = 0x4, scoped, tag = 'scoped memory for tpu_custom_call.1']
    #allocation6 [shape = 'u8[2048]{0}', space=vmem, size = 0x800, scoped, tag = 'output window, operand 0, single buffered']
    %9 = vsyncpa [#allocation4], 0
    %10 = vsyncpa [#allocation5], 0
    // Predicated region
    $region2: #{tpu_custom_call.1} parent=1 // pred_check
      _
    $region3: #{tpu_custom_call.1} parent=1 // pred_check_branch
      %12 = sbr.rel (0) target = $region5
    $region4: #{tpu_custom_call.1} parent=1 // pred_region
      _
    $region5: #{tpu_custom_call.1} parent=1 // pred_fallthru
      _
    // Predicated region
    $region6: #{tpu_custom_call.1} parent=1 // pred_check
      _
    $region7: #{tpu_custom_call.1} parent=1 // pred_check_branch
      %14 = sbr.rel (0) target = $region9
    $region8: #{tpu_custom_call.1} parent=1 // pred_region
      %s16 = ssub.s32 64, 64
      %17 = vsyncadd [#allocation4], %s16
      %s19 = sshll.u32 [#allocation3], 4
      %s20 = int_to_ptr.vmem [resolvable:$true] %s19
      %22 = dma.hbm_to_vmem [thread:$0]  %s1, 64, %s20, [#allocation4]
    $region9: #{tpu_custom_call.1} parent=1 // pred_fallthru
      _
    // Predicated region
    $region10: #{tpu_custom_call.1} parent=1 // pred_check
      _
    $region11: #{tpu_custom_call.1} parent=1 // pred_check_branch
      %24 = sbr.rel (0) target = $region13
    $region12: #{tpu_custom_call.1} parent=1 // pred_region
      _
    $region13: #{tpu_custom_call.1} parent=1 // pred_fallthru
      _
    // Predicated region
    $region14: #{tpu_custom_call.1} parent=1 // pred_check
      _
    $region15: #{tpu_custom_call.1} parent=1 // pred_check_branch
      %26 = sbr.rel (0) target = $region17
    $region16: #{tpu_custom_call.1} parent=1 // pred_region
      %27 = dma.done [#allocation4], 64
    $region17: #{tpu_custom_call.1} parent=1 // pred_fallthru
      _
    %v28 = vld [vmem:[#allocation3] sm:$0xf]
    %v29 = vmul.f32 %v28, 5.656854
    %v30 = vld [vmem:[%s2] sm:$0x3]
    %v32 = vlaneseq
    %v33 = vshrl.u32 %v32, 7
    %v34 = vsub.s32 0, %v33
    %v35 = vrot.slane %v30, %v34
    %v36 = vlaneseq
    %v37 = vshrl.u32 %v36, 7
    %v38 = vsub.s32 1, %v37
    %v39 = vrot.slane %v30, %v38
    %v40 = vcombine.low %v35, %v39
    %v42 = vunpack.c.l.s4 1983009808
    %v43 = vunpack.c.0.s8 %v42
    %v44 = vlaneseq
    %v45 = vshrl.u32 %v44, 7
    %v46 = vsub.s32 %v43, %v45
    %v47 = vrot.slane %v40, %v46
    %v49 = vadd.f32 %v29, %v47
    %50 = vst [vmem:[#allocation6] sm:$0xf] %v49
    // Predicated region
    $region18: #{tpu_custom_call.1} parent=1 // pred_check
      _
    $region19: #{tpu_custom_call.1} parent=1 // pred_check_branch
      %52 = sbr.rel (0) target = $region21
    $region20: #{tpu_custom_call.1} parent=1 // pred_region
      %s54 = ssub.s32 64, 64
      %55 = vsyncadd [#allocation5], %s54
      %s57 = sshll.u32 [#allocation6], 4
      %s58 = int_to_ptr.vmem [resolvable:$true] %s57
      %60 = dma.vmem_to_hbm [thread:$0]  %s58, 64, %s3, [#allocation5]
    $region21: #{tpu_custom_call.1} parent=1 // pred_fallthru
      _
    // Predicated region
    $region22: #{tpu_custom_call.1} parent=1 // pred_check
      _
    $region23: #{tpu_custom_call.1} parent=1 // pred_check_branch
      %62 = sbr.rel (0) target = $region25
    $region24: #{tpu_custom_call.1} parent=1 // pred_region
      %63 = dma.done [#allocation5], 64
    $region25: #{tpu_custom_call.1} parent=1 // pred_fallthru
      _
    %64 = vsyncpa [#allocation4], 1
    %65 = vsyncpa [#allocation5], 1

</llo_original>
